<compile_context>
chip_gen: v6e
topology: v6e:2x2x1
jax: 0.10.0
libtpu: 0.0.40
codegen_flags: <defaults>
</compile_context>

<pallas_src>
import functools
import math

import jax
import jax.numpy as jnp
from jax.experimental import pallas as pl
from jax.experimental.pallas import tpu as pltpu


def _attn_gate_kernel(x_ref, h_ref, wk_ref, wq_ref, wv_ref, o_ref, *,
                      scale, eps, num_layers, batch_tile, num_nodes,
                      hidden_size, in_dim):
    # x_ref : (Bt, N, din)        input block (Bt batch elements per grid step)
    # h_ref : (L, Bt, N, H)       all hidden layers for this batch block
    # wk/wv : (din, H)            projection weights (transposed vs torch)
    # wq    : (H, H)
    # o_ref : (Bt, L, N)          lane-dense gate scores (transposed in wrapper)
    f32 = jnp.float32
    x = x_ref[...].astype(f32)                       # (Bt, N, din)
    wk = wk_ref[...].astype(f32)                     # (din, H)
    wv = wv_ref[...].astype(f32)
    wq = wq_ref[...].astype(f32)                     # (H, H)

    # --- key / value projections on the VPU: K = in_dim is tiny, so broadcast
    #     FMAs beat a zero-padded MXU contraction (and need no din padding).
    key = x[:, :, 0:1] * wk[0:1, :]                  # (Bt, N, H)
    value = x[:, :, 0:1] * wv[0:1, :]
    for d in range(1, in_dim):                       # static unroll, din small
        xd = x[:, :, d:d + 1]
        key = key + xd * wk[d:d + 1, :]
        value = value + xd * wv[d:d + 1, :]
    key_s = key * scale                              # fold 1/sqrt(H) into key once

    # --- all layer queries in ONE tall MXU matmul: (L*Bt*N, H) @ (H, H)
    hq = h_ref[...].astype(f32).reshape(
        num_layers * batch_tile * num_nodes, hidden_size)
    query = jnp.dot(hq, wq, preferred_element_type=f32)
    query = query.reshape(num_layers, batch_tile, num_nodes, hidden_size)

    for l in range(num_layers):                      # static unroll (L is small)
        q_l = query[l]                               # (Bt, N, H)

        # energy = (query @ key^T) / sqrt(H)  (scale already folded into key_s)
        energy = jnp.einsum('bnh,bmh->bnm', q_l, key_s,
                            preferred_element_type=f32)        # (Bt, N, N)

        # numerically-stable softmax over the last dim
        m = jnp.max(energy, axis=-1, keepdims=True)
        p = jnp.exp(energy - m)
        denom = jnp.sum(p, axis=-1, keepdims=True)
        inv = pl.reciprocal(denom, approx=True)       # EUP vrcp
        inv = inv * (2.0 - denom * inv)               # 1 Newton step -> f32 accuracy
        score = p * inv

        out = jnp.einsum('bnm,bmh->bnh', score, value,
                         preferred_element_type=f32)           # (Bt, N, H)

        # sim = -PairwiseDistance(query, out) = -||query - out + eps||_2
        diff = q_l - out + eps
        dist = jnp.sqrt(jnp.sum(diff * diff, axis=-1))         # (Bt, N)
        o_ref[:, l, :] = (-dist).astype(o_ref.dtype)           # lane-dense row store


def _pick_batch_tile(B, L, N, H, bytes_per_elem=4, vmem_budget=8 << 20):
    """Largest batch tile that divides B, keeps >= 2 grid steps when B >= 2
    (v7x megacore sharding), and keeps the double-buffered hidden block well
    inside the scoped-VMEM budget."""
    best = 1
    for d in range(1, B + 1):
        if B % d:
            continue
        if B >= 2 and B // d < 2:
            continue                                   # keep >=2 parallel steps
        if 2 * L * d * N * H * bytes_per_elem > vmem_budget:
            continue
        best = d
    return best


def attn_gate(x, hidden, w_key, w_query, w_value, eps=1e-6):
    """AttnGate forward.

    x       : (B, N, in_dim)
    hidden  : (L, B, N, H) stacked hidden states (or a list/tuple of (B, N, H))
    w_key   : (in_dim, H)   == in_key.weight.T
    w_query : (H, H)        == hid_query.weight.T
    w_value : (in_dim, H)   == in_value.weight.T
    returns : (B, N, L)
    """
    if isinstance(hidden, (list, tuple)):
        hidden = jnp.stack(hidden, axis=0)
    L, B, N, H = hidden.shape
    assert x.shape[0] == B and x.shape[1] == N
    din = x.shape[-1]
    assert w_key.shape == (din, H) and w_value.shape == (din, H)
    assert w_query.shape == (H, H)

    bt = _pick_batch_tile(B, L, N, H)
    scale = 1.0 / math.sqrt(H)        # matches `/ query.size(-1) ** 0.5`

    kernel = functools.partial(
        _attn_gate_kernel, scale=scale, eps=eps, num_layers=L,
        batch_tile=bt, num_nodes=N, hidden_size=H, in_dim=din)

    out_bln = pl.pallas_call(
        kernel,
        out_shape=jax.ShapeDtypeStruct((B, L, N), x.dtype),
        grid_spec=pltpu.PrefetchScalarGridSpec(
            num_scalar_prefetch=0,
            grid=(B // bt,),
            in_specs=[
                pl.BlockSpec((bt, N, din), lambda b: (b, 0, 0)),     # input
                pl.BlockSpec((L, bt, N, H), lambda b: (0, b, 0, 0)),  # hidden stack
                pl.BlockSpec((din, H), lambda b: (0, 0)),             # Wk
                pl.BlockSpec((H, H), lambda b: (0, 0)),               # Wq
                pl.BlockSpec((din, H), lambda b: (0, 0)),             # Wv
            ],
            out_specs=pl.BlockSpec((bt, L, N), lambda b: (b, 0, 0)),  # lane-dense
        ),
        compiler_params=pltpu.CompilerParams(
            dimension_semantics=("parallel",),
        ),
    )(x, hidden, w_key, w_query, w_value)

    # Lane-dense (B, L, N) inside the kernel; present (B, N, L) to the caller.
    return jnp.transpose(out_bln, (0, 2, 1))


if __name__ == "__main__":
    # batch=2, num_nodes=8, in_dim=2, hidden_size=32, len(hidden)=2
    B, N, DIN, H, L = 2, 8, 2, 32, 2
    root = jax.random.PRNGKey(0)
    kx, kh, kk, kq, kv = jax.random.split(root, 5)

    x = jax.random.normal(kx, (B, N, DIN), dtype=jnp.float32)
    hidden = jax.random.normal(kh, (L, B, N, H), dtype=jnp.float32)

    def xavier(key, shape):
        fan_in, fan_out = shape
        limit = math.sqrt(6.0 / (fan_in + fan_out))
        return jax.random.uniform(key, shape, jnp.float32, -limit, limit)

    w_key = xavier(kk, (DIN, H))     # in_key.weight^T
    w_query = xavier(kq, (H, H))     # hid_query.weight^T
    w_value = xavier(kv, (DIN, H))   # in_value.weight^T

    out = attn_gate(x, hidden, w_key, w_query, w_value)
    jax.block_until_ready(out)

    # Pure-JAX reference (same math as the PyTorch module's forward).
    key_r = x @ w_key
    value_r = x @ w_value
    sims = []
    for l in range(L):
        q = hidden[l] @ w_query
        energy = jnp.einsum("bnh,bmh->bnm", q, key_r) / math.sqrt(H)
        score = jax.nn.softmax(energy, axis=-1)
        o = jnp.einsum("bnm,bmh->bnh", score, value_r)
        dist = jnp.sqrt(jnp.sum((q - o + 1e-6) ** 2, axis=-1))
        sims.append(-dist)
    ref = jnp.stack(sims, axis=-1)   # (B, N, L)

    assert out.shape == ref.shape, (out.shape, ref.shape)
    assert jnp.allclose(out, ref, atol=1e-4, rtol=1e-4), (
        "mismatch vs reference, max abs err =", float(jnp.max(jnp.abs(out - ref))))
    print("KERNEL_OK")
</pallas_src>

<mosaic_0001>
module attributes {stable_mosaic.version = 11 : i64} {
  func.func @_attn_gate_kernel(%arg0: i32, %arg1: memref<1x8x2xf32, #tpu.memory_space<vmem>>, %arg2: memref<2x1x8x32xf32, #tpu.memory_space<vmem>>, %arg3: memref<2x32xf32, #tpu.memory_space<vmem>>, %arg4: memref<32x32xf32, #tpu.memory_space<vmem>>, %arg5: memref<2x32xf32, #tpu.memory_space<vmem>>, %arg6: memref<1x2x8xf32, #tpu.memory_space<vmem>>) attributes {dimension_semantics = [#tpu.dimension_semantics<parallel>], iteration_bounds = array<i64: 2>, scalar_prefetch = 0 : i64, scratch_operands = 0 : i64, tpu.core_type = #tpu.core_type<tc>, window_params = [{transform_indices = @transform_0, window_bounds = array<i64: 1, 8, 2>}, {transform_indices = @transform_1, window_bounds = array<i64: 2, 1, 8, 32>}, {pipeline_mode = #tpu.pipeline_mode<synchronous>, transform_indices = @transform_2, window_bounds = array<i64: 2, 32>}, {pipeline_mode = #tpu.pipeline_mode<synchronous>, transform_indices = @transform_3, window_bounds = array<i64: 32, 32>}, {pipeline_mode = #tpu.pipeline_mode<synchronous>, transform_indices = @transform_4, window_bounds = array<i64: 2, 32>}, {transform_indices = @transform_5, window_bounds = array<i64: 1, 2, 8>}]} {
    %c0 = arith.constant 0 : index
    %c0_0 = arith.constant 0 : index
    %c0_1 = arith.constant 0 : index
    %0 = vector.load %arg1[%c0, %c0_0, %c0_1] : memref<1x8x2xf32, #tpu.memory_space<vmem>>, vector<1x8x2xf32>
    %c0_2 = arith.constant 0 : index
    %c0_3 = arith.constant 0 : index
    %1 = vector.load %arg3[%c0_2, %c0_3] : memref<2x32xf32, #tpu.memory_space<vmem>>, vector<2x32xf32>
    %c0_4 = arith.constant 0 : index
    %c0_5 = arith.constant 0 : index
    %2 = vector.load %arg5[%c0_4, %c0_5] : memref<2x32xf32, #tpu.memory_space<vmem>>, vector<2x32xf32>
    %c0_6 = arith.constant 0 : index
    %c0_7 = arith.constant 0 : index
    %3 = vector.load %arg4[%c0_6, %c0_7] : memref<32x32xf32, #tpu.memory_space<vmem>>, vector<32x32xf32>
    %4 = vector.extract_strided_slice %0 {offsets = [0, 0, 0], sizes = [1, 8, 1], strides = [1, 1, 1]} : vector<1x8x2xf32> to vector<1x8x1xf32>
    %5 = vector.extract_strided_slice %1 {offsets = [0, 0], sizes = [1, 32], strides = [1, 1]} : vector<2x32xf32> to vector<1x32xf32>
    %6 = vector.shape_cast %5 : vector<1x32xf32> to vector<1x1x32xf32>
    %7 = vector.broadcast %4 : vector<1x8x1xf32> to vector<1x8x32xf32>
    %8 = vector.broadcast %6 : vector<1x1x32xf32> to vector<1x8x32xf32>
    %9 = arith.mulf %7, %8 : vector<1x8x32xf32>
    %10 = vector.extract_strided_slice %0 {offsets = [0, 0, 0], sizes = [1, 8, 1], strides = [1, 1, 1]} : vector<1x8x2xf32> to vector<1x8x1xf32>
    %11 = vector.extract_strided_slice %2 {offsets = [0, 0], sizes = [1, 32], strides = [1, 1]} : vector<2x32xf32> to vector<1x32xf32>
    %12 = vector.shape_cast %11 : vector<1x32xf32> to vector<1x1x32xf32>
    %13 = vector.broadcast %10 : vector<1x8x1xf32> to vector<1x8x32xf32>
    %14 = vector.broadcast %12 : vector<1x1x32xf32> to vector<1x8x32xf32>
    %15 = arith.mulf %13, %14 : vector<1x8x32xf32>
    %16 = vector.extract_strided_slice %0 {offsets = [0, 0, 1], sizes = [1, 8, 1], strides = [1, 1, 1]} : vector<1x8x2xf32> to vector<1x8x1xf32>
    %17 = vector.extract_strided_slice %1 {offsets = [1, 0], sizes = [1, 32], strides = [1, 1]} : vector<2x32xf32> to vector<1x32xf32>
    %18 = vector.shape_cast %17 : vector<1x32xf32> to vector<1x1x32xf32>
    %19 = vector.broadcast %16 : vector<1x8x1xf32> to vector<1x8x32xf32>
    %20 = vector.broadcast %18 : vector<1x1x32xf32> to vector<1x8x32xf32>
    %21 = arith.mulf %19, %20 : vector<1x8x32xf32>
    %22 = arith.addf %9, %21 : vector<1x8x32xf32>
    %23 = vector.extract_strided_slice %2 {offsets = [1, 0], sizes = [1, 32], strides = [1, 1]} : vector<2x32xf32> to vector<1x32xf32>
    %24 = vector.shape_cast %23 : vector<1x32xf32> to vector<1x1x32xf32>
    %25 = vector.broadcast %16 : vector<1x8x1xf32> to vector<1x8x32xf32>
    %26 = vector.broadcast %24 : vector<1x1x32xf32> to vector<1x8x32xf32>
    %27 = arith.mulf %25, %26 : vector<1x8x32xf32>
    %28 = arith.addf %15, %27 : vector<1x8x32xf32>
    %cst = arith.constant 0.176776692 : f32
    %29 = vector.broadcast %cst : f32 to vector<1x8x32xf32>
    %30 = arith.mulf %22, %29 : vector<1x8x32xf32>
    %c0_8 = arith.constant 0 : index
    %c0_9 = arith.constant 0 : index
    %c0_10 = arith.constant 0 : index
    %c0_11 = arith.constant 0 : index
    %31 = vector.load %arg2[%c0_8, %c0_9, %c0_10, %c0_11] : memref<2x1x8x32xf32, #tpu.memory_space<vmem>>, vector<2x1x8x32xf32>
    %32 = vector.shape_cast %31 : vector<2x1x8x32xf32> to vector<16x32xf32>
    %cst_12 = arith.constant dense<0.000000e+00> : vector<16x32xf32>
    %33 = tpu.matmul %32, %3, %cst_12 {dimension_numbers = #tpu.dot_dimension_numbers<[1], [0], [0], [1], [0, 0, 1, 1], [], []>} : vector<16x32xf32>, vector<32x32xf32>, vector<16x32xf32> -> vector<16x32xf32>
    %34 = vector.shape_cast %33 : vector<16x32xf32> to vector<2x1x8x32xf32>
    %35 = vector.extract_strided_slice %34 {offsets = [0, 0, 0, 0], sizes = [1, 1, 8, 32], strides = [1, 1, 1, 1]} : vector<2x1x8x32xf32> to vector<1x1x8x32xf32>
    %36 = vector.shape_cast %35 : vector<1x1x8x32xf32> to vector<1x8x32xf32>
    "tpu.trace_start"() <{level = 10 : i32, message = "bnh,bmh->bnm"}> : () -> ()
    %cst_13 = arith.constant dense<0.000000e+00> : vector<1x8x8xf32>
    %37 = tpu.matmul %36, %30, %cst_13 {dimension_numbers = #tpu.dot_dimension_numbers<[2], [2], [1], [1], [0, 0, 0, 1, 1, 1], [0], [0]>} : vector<1x8x32xf32>, vector<1x8x32xf32>, vector<1x8x8xf32> -> vector<1x8x8xf32>
    "tpu.trace_stop"() : () -> ()
    %cst_14 = arith.constant dense<0xFF800000> : vector<1x8xf32>
    %38 = vector.multi_reduction <maximumf>, %37, %cst_14 [2] : vector<1x8x8xf32> to vector<1x8xf32>
    %39 = vector.shape_cast %38 : vector<1x8xf32> to vector<1x8x1xf32>
    %40 = vector.broadcast %39 : vector<1x8x1xf32> to vector<1x8x8xf32>
    %41 = arith.subf %37, %40 : vector<1x8x8xf32>
    %42 = math.exp %41 : vector<1x8x8xf32>
    %cst_15 = arith.constant dense<0.000000e+00> : vector<1x8xf32>
    %43 = vector.multi_reduction <add>, %42, %cst_15 [2] : vector<1x8x8xf32> to vector<1x8xf32>
    %44 = vector.shape_cast %43 : vector<1x8xf32> to vector<1x8x1xf32>
    %45 = tpu.reciprocal %44 {approx = true} : vector<1x8x1xf32> -> vector<1x8x1xf32>
    %46 = arith.mulf %44, %45 : vector<1x8x1xf32>
    %cst_16 = arith.constant 2.000000e+00 : f32
    %47 = vector.broadcast %cst_16 : f32 to vector<1x8x1xf32>
    %48 = arith.subf %47, %46 : vector<1x8x1xf32>
    %49 = arith.mulf %45, %48 : vector<1x8x1xf32>
    %50 = vector.broadcast %49 : vector<1x8x1xf32> to vector<1x8x8xf32>
    %51 = arith.mulf %42, %50 : vector<1x8x8xf32>
    "tpu.trace_start"() <{level = 10 : i32, message = "bnm,bmh->bnh"}> : () -> ()
    %cst_17 = arith.constant dense<0.000000e+00> : vector<1x8x32xf32>
    %52 = tpu.matmul %51, %28, %cst_17 {dimension_numbers = #tpu.dot_dimension_numbers<[2], [1], [1], [2], [0, 0, 0, 1, 1, 2], [0], [0]>} : vector<1x8x8xf32>, vector<1x8x32xf32>, vector<1x8x32xf32> -> vector<1x8x32xf32>
    "tpu.trace_stop"() : () -> ()
    %53 = arith.subf %36, %52 : vector<1x8x32xf32>
    %cst_18 = arith.constant 9.99999997E-7 : f32
    %54 = vector.broadcast %cst_18 : f32 to vector<1x8x32xf32>
    %55 = arith.addf %53, %54 : vector<1x8x32xf32>
    %56 = arith.mulf %55, %55 : vector<1x8x32xf32>
    %cst_19 = arith.constant dense<0.000000e+00> : vector<1x8xf32>
    %57 = vector.multi_reduction <add>, %56, %cst_19 [2] : vector<1x8x32xf32> to vector<1x8xf32>
    %58 = math.sqrt %57 : vector<1x8xf32>
    %cst_20 = arith.constant 0.000000e+00 : f32
    %59 = vector.broadcast %cst_20 : f32 to vector<1x8xf32>
    %60 = arith.subf %59, %58 : vector<1x8xf32>
    %c0_21 = arith.constant 0 : index
    %c0_22 = arith.constant 0 : index
    %c0_23 = arith.constant 0 : index
    %61 = vector.load %arg6[%c0_21, %c0_22, %c0_23] : memref<1x2x8xf32, #tpu.memory_space<vmem>>, vector<1x1x8xf32>
    %62 = vector.shape_cast %61 : vector<1x1x8xf32> to vector<1x8xf32>
    %63 = vector.shape_cast %60 : vector<1x8xf32> to vector<1x1x8xf32>
    tpu.vector_store %arg6[%c0_21, %c0_22, %c0_23], %63 {strides = array<i32>} : memref<1x2x8xf32, #tpu.memory_space<vmem>>, vector<1x1x8xf32>,
    %64 = vector.extract_strided_slice %34 {offsets = [1, 0, 0, 0], sizes = [1, 1, 8, 32], strides = [1, 1, 1, 1]} : vector<2x1x8x32xf32> to vector<1x1x8x32xf32>
    %65 = vector.shape_cast %64 : vector<1x1x8x32xf32> to vector<1x8x32xf32>
    "tpu.trace_start"() <{level = 10 : i32, message = "bnh,bmh->bnm"}> : () -> ()
    %cst_24 = arith.constant dense<0.000000e+00> : vector<1x8x8xf32>
    %66 = tpu.matmul %65, %30, %cst_24 {dimension_numbers = #tpu.dot_dimension_numbers<[2], [2], [1], [1], [0, 0, 0, 1, 1, 1], [0], [0]>} : vector<1x8x32xf32>, vector<1x8x32xf32>, vector<1x8x8xf32> -> vector<1x8x8xf32>
    "tpu.trace_stop"() : () -> ()
    %cst_25 = arith.constant dense<0xFF800000> : vector<1x8xf32>
    %67 = vector.multi_reduction <maximumf>, %66, %cst_25 [2] : vector<1x8x8xf32> to vector<1x8xf32>
    %68 = vector.shape_cast %67 : vector<1x8xf32> to vector<1x8x1xf32>
    %69 = vector.broadcast %68 : vector<1x8x1xf32> to vector<1x8x8xf32>
    %70 = arith.subf %66, %69 : vector<1x8x8xf32>
    %71 = math.exp %70 : vector<1x8x8xf32>
    %cst_26 = arith.constant dense<0.000000e+00> : vector<1x8xf32>
    %72 = vector.multi_reduction <add>, %71, %cst_26 [2] : vector<1x8x8xf32> to vector<1x8xf32>
    %73 = vector.shape_cast %72 : vector<1x8xf32> to vector<1x8x1xf32>
    %74 = tpu.reciprocal %73 {approx = true} : vector<1x8x1xf32> -> vector<1x8x1xf32>
    %75 = arith.mulf %73, %74 : vector<1x8x1xf32>
    %cst_27 = arith.constant 2.000000e+00 : f32
    %76 = vector.broadcast %cst_27 : f32 to vector<1x8x1xf32>
    %77 = arith.subf %76, %75 : vector<1x8x1xf32>
    %78 = arith.mulf %74, %77 : vector<1x8x1xf32>
    %79 = vector.broadcast %78 : vector<1x8x1xf32> to vector<1x8x8xf32>
    %80 = arith.mulf %71, %79 : vector<1x8x8xf32>
    "tpu.trace_start"() <{level = 10 : i32, message = "bnm,bmh->bnh"}> : () -> ()
    %cst_28 = arith.constant dense<0.000000e+00> : vector<1x8x32xf32>
    %81 = tpu.matmul %80, %28, %cst_28 {dimension_numbers = #tpu.dot_dimension_numbers<[2], [1], [1], [2], [0, 0, 0, 1, 1, 2], [0], [0]>} : vector<1x8x8xf32>, vector<1x8x32xf32>, vector<1x8x32xf32> -> vector<1x8x32xf32>
    "tpu.trace_stop"() : () -> ()
    %82 = arith.subf %65, %81 : vector<1x8x32xf32>
    %cst_29 = arith.constant 9.99999997E-7 : f32
    %83 = vector.broadcast %cst_29 : f32 to vector<1x8x32xf32>
    %84 = arith.addf %82, %83 : vector<1x8x32xf32>
    %85 = arith.mulf %84, %84 : vector<1x8x32xf32>
    %cst_30 = arith.constant dense<0.000000e+00> : vector<1x8xf32>
    %86 = vector.multi_reduction <add>, %85, %cst_30 [2] : vector<1x8x32xf32> to vector<1x8xf32>
    %87 = math.sqrt %86 : vector<1x8xf32>
    %cst_31 = arith.constant 0.000000e+00 : f32
    %88 = vector.broadcast %cst_31 : f32 to vector<1x8xf32>
    %89 = arith.subf %88, %87 : vector<1x8xf32>
    %c0_32 = arith.constant 0 : index
    %c1 = arith.constant 1 : index
    %c0_33 = arith.constant 0 : index
    %90 = vector.load %arg6[%c0_32, %c1, %c0_33] : memref<1x2x8xf32, #tpu.memory_space<vmem>>, vector<1x1x8xf32>
    %91 = vector.shape_cast %90 : vector<1x1x8xf32> to vector<1x8xf32>
    %92 = vector.shape_cast %89 : vector<1x8xf32> to vector<1x1x8xf32>
    tpu.vector_store %arg6[%c0_32, %c1, %c0_33], %92 {strides = array<i32>} : memref<1x2x8xf32, #tpu.memory_space<vmem>>, vector<1x1x8xf32>,
    return
  }
  func.func @transform_0(%arg0: i32) -> (i32, i32, i32) {
    %c0_i32 = arith.constant 0 : i32
    %c0_i32_0 = arith.constant 0 : i32
    %c0_i32_1 = arith.constant 0 : i32
    return %arg0, %c0_i32, %c0_i32_0 : i32, i32, i32
  }
  func.func @transform_1(%arg0: i32) -> (i32, i32, i32, i32) {
    %c0_i32 = arith.constant 0 : i32
    %c0_i32_0 = arith.constant 0 : i32
    %c0_i32_1 = arith.constant 0 : i32
    %c0_i32_2 = arith.constant 0 : i32
    return %c0_i32, %arg0, %c0_i32_0, %c0_i32_1 : i32, i32, i32, i32
  }
  func.func @transform_2(%arg0: i32) -> (i32, i32) {
    %c0_i32 = arith.constant 0 : i32
    %c0_i32_0 = arith.constant 0 : i32
    %c0_i32_1 = arith.constant 0 : i32
    return %c0_i32, %c0_i32_0 : i32, i32
  }
  func.func @transform_3(%arg0: i32) -> (i32, i32) {
    %c0_i32 = arith.constant 0 : i32
    %c0_i32_0 = arith.constant 0 : i32
    %c0_i32_1 = arith.constant 0 : i32
    return %c0_i32, %c0_i32_0 : i32, i32
  }
  func.func @transform_4(%arg0: i32) -> (i32, i32) {
    %c0_i32 = arith.constant 0 : i32
    %c0_i32_0 = arith.constant 0 : i32
    %c0_i32_1 = arith.constant 0 : i32
    return %c0_i32, %c0_i32_0 : i32, i32
  }
  func.func @transform_5(%arg0: i32) -> (i32, i32, i32) {
    %c0_i32 = arith.constant 0 : i32
    %c0_i32_0 = arith.constant 0 : i32
    %c0_i32_1 = arith.constant 0 : i32
    return %arg0, %c0_i32, %c0_i32_0 : i32, i32, i32
  }
}

</mosaic_0001>

<llo_original>
// kernel: tpu_custom_call.1
$region0: #{tpu_custom_call.1}
  #allocation0 [shape = 'u32[]', space=smem, size = 0x4, offset = 0x4, fixed_abs, tag = 'smem constant byte address 0x4 - core index']
  #allocation1 [shape = 'u32[144,128]{1,0:T(1,128)}', space=vmem, size = 0x12000, scoped, tag = 'internal scratch']
  %s0 = inlined_call_operand.vmem [shape: f32[2,8,2], index: 0, kind: input, shape index: {}]
  %s1 = inlined_call_operand.hbm [shape: f32[2,2,8,32], index: 1, kind: input, shape index: {}]
  %s2 = inlined_call_operand.vmem [shape: f32[2,32], index: 2, kind: input, shape index: {}]
  %s3 = inlined_call_operand.hbm [shape: f32[32,32], index: 3, kind: input, shape index: {}]
  %s4 = inlined_call_operand.vmem [shape: f32[2,32], index: 4, kind: input, shape index: {}]
  %s5 = inlined_call_operand.hbm [shape: f32[2,2,8], index: 5, kind: output, shape index: {}]
  %s6 = sld [smem:[#allocation0]]
  $region61: #{tpu_custom_call.1} parent=0
    _
  %s8 = ssub.s32 1, %s6
  %s9 = scalar_select 0, %s8, %s6
  $region1: #{tpu_custom_call.1} parent=0
    #allocation2 [shape = 'u8[16384]{0}', space=vmem, size = 0x4000, scoped, tag = 'input window, operand 1']
    #allocation3 [shape = 's32[2]{0}', space=sflag, size = 0x8, scoped, tag = 'scoped memory for tpu_custom_call.1']
    #allocation4 [shape = 's32[2]{0}', space=sflag, size = 0x8, scoped, tag = 'scoped memory for tpu_custom_call.1']
    #allocation5 [shape = 'u8[16384]{0}', space=vmem, size = 0x4000, scoped, tag = 'input window, operand 3, single buffered']
    #allocation6 [shape = 's32[1]{0}', space=sflag, size = 0x4, scoped, tag = 'scoped memory for tpu_custom_call.1']
    #allocation7 [shape = 'u8[2048]{0}', space=vmem, size = 0x800, scoped, tag = 'output window, operand 0']
    %10 = vsyncpa [#allocation3], 0
    %s11 = scalar_lea.sflag [#allocation3], 1
    %12 = vsyncpa %s11, 0
    %13 = vsyncpa [#allocation6], 0
    %14 = vsyncpa [#allocation4], 0
    %s15 = scalar_lea.sflag [#allocation4], 1
    %16 = vsyncpa %s15, 0
    loop: start=0, step=1, limit=4
    $region2: #{tpu_custom_call.1} parent=1 // loop_pre_header
      _
    $region3: #{tpu_custom_call.1} parent=1 // loop_header
      %s18 = sphi 0, %s22
      %p19 = scmp.ge.s32.totalorder %s18, 4
      %s28 = sphi 0, %s30
      %s31 = sphi 0, %s28
      %s32 = sphi 0, %s31
      %s48 = sphi 0, %s32
      %s54 = sphi 0, %s56
      %s57 = sphi 0, %s54
      %s58 = sphi 0, %s57
      %s74 = sphi 0, %s58
      %s78 = sphi 0, %s78
      %s80 = sphi 0, %s78
      %s81 = sphi 0, %s80
      %s95 = sphi 0, %s81
      %s99 = sphi 0, %s99
      %s101 = sphi 0, %s99
      %s102 = sphi 0, %s101
      %s116 = sphi 0, %s102
      %s120 = sphi 0, %s120
      %s122 = sphi 0, %s120
      %s123 = sphi 0, %s122
      %s137 = sphi 0, %s123
      %s143 = sphi 0, %s145
      %s146 = sphi 0, %s143
      %s147 = sphi 0, %s146
      %s163 = sphi 0, %s147
    $region4: #{tpu_custom_call.1} parent=1 // loop_header_branch
      %21 = sbr.rel (%p19) target = $region8
    $region5: #{tpu_custom_call.1} parent=1 // loop_body
      %s23 = ssub.s32 %s18, 1
      %s24 = ssub.s32 %s18, 2
      %s25 = sadd.s32 %s18, 1
      %s26 = ssub.s32 %s18, %s25
      %p27 = scmp.eq.s32.totalorder %s26, 0
      %s29 = sadd.s32 %s28, 1
      %s30 = scalar_select %p27, %s28, %s29
      %p33 = pneg %p27
      %p34 = scmp.eq.s32.totalorder %s18, 1
      %p35 = por %p33, %p34
      %p36 = scmp.ne.s32.totalorder %s28, %s31
      %p37 = scmp.eq.s32.totalorder %s18, 0
      %p38 = por %p36, %p37
      %p39 = scmp.ne.s32.totalorder %s28, %s31
      %p40 = scmp.eq.s32.totalorder %s23, 1
      %p41 = por %p39, %p40
      %p42 = scmp.ne.s32.totalorder %s31, %s32
      %p43 = scmp.eq.s32.totalorder %s23, 0
      %p44 = por %p42, %p43
      %p45 = scmp.ne.s32.totalorder %s31, %s32
      %p46 = scmp.eq.s32.totalorder %s24, 1
      %p47 = por %p45, %p46
      %p49 = scmp.ne.s32.totalorder %s32, %s48
      %p50 = scmp.eq.s32.totalorder %s24, 0
      %p51 = por %p49, %p50
      %s52 = ssub.s32 %s18, %s25
      %p53 = scmp.eq.s32.totalorder %s52, 0
      %s55 = sadd.s32 %s54, 1
      %s56 = scalar_select %p53, %s54, %s55
      %p59 = pneg %p53
      %p60 = scmp.eq.s32.totalorder %s18, 1
      %p61 = por %p59, %p60
      %p62 = scmp.ne.s32.totalorder %s54, %s57
      %p63 = scmp.eq.s32.totalorder %s18, 0
      %p64 = por %p62, %p63
      %p65 = scmp.ne.s32.totalorder %s54, %s57
      %p66 = scmp.eq.s32.totalorder %s23, 1
      %p67 = por %p65, %p66
      %p68 = scmp.ne.s32.totalorder %s57, %s58
      %p69 = scmp.eq.s32.totalorder %s23, 0
      %p70 = por %p68, %p69
      %p71 = scmp.ne.s32.totalorder %s57, %s58
      %p72 = scmp.eq.s32.totalorder %s24, 1
      %p73 = por %p71, %p72
      %p75 = scmp.ne.s32.totalorder %s58, %s74
      %p76 = scmp.eq.s32.totalorder %s24, 0
      %p77 = por %p75, %p76
      %s79 = sadd.s32 %s78, 1
      %p82 = scmp.eq.s32.totalorder %s18, 1
      %p83 = scmp.ne.s32.totalorder %s78, %s80
      %p84 = scmp.eq.s32.totalorder %s18, 0
      %p85 = por %p83, %p84
      %p86 = scmp.ne.s32.totalorder %s78, %s80
      %p87 = scmp.eq.s32.totalorder %s23, 1
      %p88 = por %p86, %p87
      %p89 = scmp.ne.s32.totalorder %s80, %s81
      %p90 = scmp.eq.s32.totalorder %s23, 0
      %p91 = por %p89, %p90
      %p92 = scmp.ne.s32.totalorder %s80, %s81
      %p93 = scmp.eq.s32.totalorder %s24, 1
      %p94 = por %p92, %p93
      %p96 = scmp.ne.s32.totalorder %s81, %s95
      %p97 = scmp.eq.s32.totalorder %s24, 0
      %p98 = por %p96, %p97
      %s100 = sadd.s32 %s99, 1
      %p103 = scmp.eq.s32.totalorder %s18, 1
      %p104 = scmp.ne.s32.totalorder %s99, %s101
      %p105 = scmp.eq.s32.totalorder %s18, 0
      %p106 = por %p104, %p105
      %p107 = scmp.ne.s32.totalorder %s99, %s101
      %p108 = scmp.eq.s32.totalorder %s23, 1
      %p109 = por %p107, %p108
      %p110 = scmp.ne.s32.totalorder %s101, %s102
      %p111 = scmp.eq.s32.totalorder %s23, 0
      %p112 = por %p110, %p111
      %p113 = scmp.ne.s32.totalorder %s101, %s102
      %p114 = scmp.eq.s32.totalorder %s24, 1
      %p115 = por %p113, %p114
      %p117 = scmp.ne.s32.totalorder %s102, %s116
      %p118 = scmp.eq.s32.totalorder %s24, 0
      %p119 = por %p117, %p118
      %s121 = sadd.s32 %s120, 1
      %p124 = scmp.eq.s32.totalorder %s18, 1
      %p125 = scmp.ne.s32.totalorder %s120, %s122
      %p126 = scmp.eq.s32.totalorder %s18, 0
      %p127 = por %p125, %p126
      %p128 = scmp.ne.s32.totalorder %s120, %s122
      %p129 = scmp.eq.s32.totalorder %s23, 1
      %p130 = por %p128, %p129
      %p131 = scmp.ne.s32.totalorder %s122, %s123
      %p132 = scmp.eq.s32.totalorder %s23, 0
      %p133 = por %p131, %p132
      %p134 = scmp.ne.s32.totalorder %s122, %s123
      %p135 = scmp.eq.s32.totalorder %s24, 1
      %p136 = por %p134, %p135
      %p138 = scmp.ne.s32.totalorder %s123, %s137
      %p139 = scmp.eq.s32.totalorder %s24, 0
      %p140 = por %p138, %p139
      %s141 = ssub.s32 %s18, %s25
      %p142 = scmp.eq.s32.totalorder %s141, 0
      %s144 = sadd.s32 %s143, 1
      %s145 = scalar_select %p142, %s143, %s144
      %p148 = pneg %p142
      %p149 = scmp.eq.s32.totalorder %s18, 1
      %p150 = por %p148, %p149
      %p151 = scmp.ne.s32.totalorder %s143, %s146
      %p152 = scmp.eq.s32.totalorder %s18, 0
      %p153 = por %p151, %p152
      %p154 = scmp.ne.s32.totalorder %s143, %s146
      %p155 = scmp.eq.s32.totalorder %s23, 1
      %p156 = por %p154, %p155
      %p157 = scmp.ne.s32.totalorder %s146, %s147
      %p158 = scmp.eq.s32.totalorder %s23, 0
      %p159 = por %p157, %p158
      %p160 = scmp.ne.s32.totalorder %s146, %s147
      %p161 = scmp.eq.s32.totalorder %s24, 1
      %p162 = por %p160, %p161
      %p164 = scmp.ne.s32.totalorder %s147, %s163
      %p165 = scmp.eq.s32.totalorder %s24, 0
      %p166 = por %p164, %p165
      %p167 = scmp.le.s32.totalorder 1, %s18
      %p168 = scmp.lt.s32.totalorder %s18, 3
      %p169 = pnand %p167, %p168
      %p170 = pneg %p169
      // Predicated region
      $region9: #{tpu_custom_call.1} parent=5 // pred_check
        _
      $region10: #{tpu_custom_call.1} parent=5 // pred_check_branch
        %172 = sbr.rel (%p169) target = $region12
      $region11: #{tpu_custom_call.1} parent=5 // pred_region
        %s173 = ssub.s32 %s18, 1
        // Predicated region
        $region13: #{tpu_custom_call.1} parent=11 // pred_check
          %p174 = pneg %p91
        $region14: #{tpu_custom_call.1} parent=11 // pred_check_branch
          %176 = sbr.rel (%p174) target = $region16
        $region15: #{tpu_custom_call.1} parent=11 // pred_region
          _
        $region16: #{tpu_custom_call.1} parent=11 // pred_fallthru
          _
        // Predicated region
        $region17: #{tpu_custom_call.1} parent=11 // pred_check
          %p177 = pneg %p112
        $region18: #{tpu_custom_call.1} parent=11 // pred_check_branch
          %179 = sbr.rel (%p177) target = $region20
        $region19: #{tpu_custom_call.1} parent=11 // pred_region
          %s181 = ssub.s32 512, 512
          %182 = vsyncadd [#allocation6], %s181
          %s183 = sshll.u32 [#allocation5], 4
          %s184 = int_to_ptr.vmem [resolvable:$true] %s183
          %189 = dma.hbm_to_vmem [thread:$0]  %s3, 512, %s184, [#allocation6], 128, 128, 8
        $region20: #{tpu_custom_call.1} parent=11 // pred_fallthru
          _
        // Predicated region
        $region21: #{tpu_custom_call.1} parent=11 // pred_check
          %p190 = pneg %p133
        $region22: #{tpu_custom_call.1} parent=11 // pred_check_branch
          %192 = sbr.rel (%p190) target = $region24
        $region23: #{tpu_custom_call.1} parent=11 // pred_region
          _
        $region24: #{tpu_custom_call.1} parent=11 // pred_fallthru
          _
      $region12: #{tpu_custom_call.1} parent=5 // pred_fallthru
        _
      %p193 = scmp.lt.s32.totalorder %s18, 2
      // Predicated region
      $region25: #{tpu_custom_call.1} parent=5 // pred_check
        %p194 = pneg %p193
      $region26: #{tpu_custom_call.1} parent=5 // pred_check_branch
        %196 = sbr.rel (%p194) target = $region28
      $region27: #{tpu_custom_call.1} parent=5 // pred_region
        // Predicated region
        $region29: #{tpu_custom_call.1} parent=27 // pred_check
          %p197 = pneg %p38
        $region30: #{tpu_custom_call.1} parent=27 // pred_check_branch
          %199 = sbr.rel (%p197) target = $region32
        $region31: #{tpu_custom_call.1} parent=27 // pred_region
          %p200 = scmp.lt.s32.totalorder %s18, 1
          %s201 = scalar_select %p200, %s18, 1
          %s202 = smul.addr %s201, 8
          %s203 = scalar_lea.vmem %s0, %s202
        $region32: #{tpu_custom_call.1} parent=27 // pred_fallthru
          _
        // Predicated region
        $region33: #{tpu_custom_call.1} parent=27 // pred_check
          %p204 = pneg %p64
        $region34: #{tpu_custom_call.1} parent=27 // pred_check_branch
          %206 = sbr.rel (%p204) target = $region36
        $region35: #{tpu_custom_call.1} parent=27 // pred_region
          %s207 = sand.u32 %s54, 1
          %s208 = scalar_lea.sflag [#allocation3], %s207
          %s209 = sand.u32 %s54, 1
          %s210 = smul.addr %s209, 16
          %s211 = scalar_lea.vmem [#allocation2], %s210
          %s213 = ssub.s32 256, 256
          %214 = vsyncadd %s208, %s213
          %s215 = smul.addr %s18, 128
          %s216 = scalar_lea.hbm %s1, %s215
          %s217 = sshll.u32 %s211, 4
          %s218 = int_to_ptr.vmem [resolvable:$true] %s217
          %223 = dma.hbm_to_vmem [thread:$0]  %s216, 256, %s218, %s208, 256, 128, 8
        $region36: #{tpu_custom_call.1} parent=27 // pred_fallthru
          _
      $region28: #{tpu_custom_call.1} parent=5 // pred_fallthru
        _
      %p224 = scmp.le.s32.totalorder 1, %s18
      %p225 = scmp.lt.s32.totalorder %s18, 3
      %p226 = pnand %p224, %p225
      %p227 = pneg %p226
      // Predicated region
      $region37: #{tpu_custom_call.1} parent=5 // pred_check
        _
      $region38: #{tpu_custom_call.1} parent=5 // pred_check_branch
        %229 = sbr.rel (%p226) target = $region40
      $region39: #{tpu_custom_call.1} parent=5 // pred_region
        %s230 = ssub.s32 %s18, 1
        %s231 = sand.u32 %s57, 1
        %s232 = scalar_lea.sflag [#allocation3], %s231
        %s233 = sand.u32 %s57, 1
        %s234 = smul.addr %s233, 16
        %s235 = scalar_lea.vmem [#allocation2], %s234
        // Predicated region
        $region41: #{tpu_custom_call.1} parent=39 // pred_check
          %p236 = pneg %p70
        $region42: #{tpu_custom_call.1} parent=39 // pred_check_branch
          %238 = sbr.rel (%p236) target = $region44
        $region43: #{tpu_custom_call.1} parent=39 // pred_region
          %239 = dma.done %s232, 256
        $region44: #{tpu_custom_call.1} parent=39 // pred_fallthru
          _
        // Predicated region
        $region45: #{tpu_custom_call.1} parent=39 // pred_check
          %p240 = pneg %p112
        $region46: #{tpu_custom_call.1} parent=39 // pred_check_branch
          %242 = sbr.rel (%p240) target = $region48
        $region47: #{tpu_custom_call.1} parent=39 // pred_region
          %243 = dma.done [#allocation6], 512
        $region48: #{tpu_custom_call.1} parent=39 // pred_fallthru
          _
        %p244 = scmp.lt.s32.totalorder %s23, 1
        %s245 = scalar_select %p244, %s23, 1
        %s246 = smul.addr %s245, 8
        %s247 = scalar_lea.vmem %s0, %s246
        %p248 = pneg %p44
        %p249 = pneg %p41
        %s250 = sand.u32 %s57, 1
        %s251 = scalar_lea.sflag [#allocation3], %s250
        %s252 = sand.u32 %s57, 1
        %s253 = smul.addr %s252, 16
        %s254 = scalar_lea.vmem [#allocation2], %s253
        %p255 = pneg %p70
        %p256 = pneg %p67
        %p257 = pneg %p91
        %p258 = pneg %p88
        %p259 = pneg %p112
        %p260 = pneg %p109
        %p261 = pneg %p133
        %p262 = pneg %p130
        %p263 = pneg %p159
        %p264 = pneg %p156
        %s265 = sand.u32 %s146, 1
        %s266 = scalar_lea.sflag [#allocation4], %s265
        %s267 = sand.u32 %s146, 1
        %s268 = smul.addr %s267, 2
        %s269 = scalar_lea.vmem [#allocation7], %s268
        %p270 = scmp.lt.s32.totalorder %s23, 1
        %s271 = scalar_select %p270, %s23, 1
        %s272 = smul.addr %s271, 8
        %s273 = scalar_lea.vmem %s0, %s272
        %v274 = vld [vmem:[%s273] sm:$0xff]
        %v275 = vld [vmem:[%s2] sm:$0x3]
        %v276 = vld [vmem:[%s4] sm:$0x3]
        %v277 = vld [vmem:[#allocation5] sm:$0xff]
        %v278 = vld [vmem:[#allocation5 + $0x8] sm:$0xff]
        %v279 = vld [vmem:[#allocation5 + $0x10] sm:$0xff]
        %v280 = vld [vmem:[#allocation5 + $0x18] sm:$0xff]
        %282 = vset.pattern.permute.xlu0 0
        %283 = vperm.xlu0 %282, %v274
        %v284 = vpop.permute.xlu0 %283
        %v286 = vlaneseq
        %v287 = vshrl.u32 %v286, 7
        %v288 = vsub.s32 0, %v287
        %v289 = vrot.slane %v275, %v288
        %v290 = vmul.f32 %v284, %v289
        %v291 = vlaneseq
        %v292 = vshrl.u32 %v291, 7
        %v293 = vsub.s32 0, %v292
        %v294 = vrot.slane %v276, %v293
        %v295 = vmul.f32 %v284, %v294
        %296 = vset.pattern.permute.xlu0 1
        %297 = vperm.xlu0 %296, %v274
        %v298 = vpop.permute.xlu0 %297
        %v300 = vlaneseq
        %v301 = vshrl.u32 %v300, 7
        %v302 = vsub.s32 1, %v301
        %v303 = vrot.slane %v275, %v302
        %v304 = vmul.f32 %v298, %v303
        %v305 = vadd.f32 %v290, %v304
        %v306 = vlaneseq
        %v307 = vshrl.u32 %v306, 7
        %v308 = vsub.s32 1, %v307
        %v309 = vrot.slane %v276, %v308
        %v310 = vmul.f32 %v298, %v309
        %v311 = vadd.f32 %v295, %v310
        %v312 = vmul.f32 %v305, 0.17677669
        %v313 = vld [vmem:[%s235] sm:$0xff]
        %v314 = vld [vmem:[%s235 + $0x8] sm:$0xff]
        %vm315 = vcmask 261120
        %v317 = vsel %vm315, %v313, 0
        %v320 = vsel %vm315, %v314, 0
        %322 = vmatprep.subr.mxu0 0.0
        %323 = vmatpush1.msra.mxu0 0.0
        %324 = vmatprep.subr.mxu0 0.0
        %325 = vmatpush1.msra.mxu0 0.0
        %326 = vmatprep.subr.mxu0 0.0
        %327 = vmatpush1.msra.mxu0 0.0
        %328 = vmatprep.subr.mxu0 0.0
        %329 = vmatpush1.msra.mxu0 0.0
        %330 = vmatprep.subr.mxu0 0.0
        %331 = vmatpush1.msra.mxu0 0.0
        %332 = vmatprep.subr.mxu0 0.0
        %333 = vmatpush1.msra.mxu0 0.0
        %334 = vmatprep.subr.mxu0 0.0
        %335 = vmatpush1.msra.mxu0 0.0
        %336 = vmatprep.subr.mxu0 0.0
        %337 = vmatpush1.msra.mxu0 0.0
        %338 = vmatprep.subr.mxu0 0.0
        %339 = vmatpush1.msra.mxu0 0.0
        %340 = vmatprep.subr.mxu0 0.0
        %341 = vmatpush1.msra.mxu0 0.0
        %342 = vmatprep.subr.mxu0 0.0
        %343 = vmatpush1.msra.mxu0 0.0
        %344 = vmatprep.subr.mxu0 0.0
        %345 = vmatpush1.msra.mxu0 0.0
        %346 = vmatprep.subr.mxu0 0.0
        %347 = vmatpush1.msra.mxu0 %v280
        %348 = vmatprep.subr.mxu0 0.0
        %349 = vmatpush1.msra.mxu0 %v279
        %350 = vmatprep.subr.mxu0 0.0
        %351 = vmatpush1.msra.mxu0 %v278
        %352 = vmatprep.subr.mxu0 0.0
        %353 = vmatpush1.msra.mxu0 %v277
        %354 = vmatprep.subr.mxu0 0.0
        %355 = vmatpush2.msra.mxu0 0.0
        %356 = vmatprep.subr.mxu0 0.0
        %357 = vmatpush2.msra.mxu0 0.0
        %358 = vmatprep.subr.mxu0 0.0
        %359 = vmatpush2.msra.mxu0 0.0
        %360 = vmatprep.subr.mxu0 0.0
        %361 = vmatpush2.msra.mxu0 0.0
        %362 = vmatprep.subr.mxu0 0.0
        %363 = vmatpush2.msra.mxu0 0.0
        %364 = vmatprep.subr.mxu0 0.0
        %365 = vmatpush2.msra.mxu0 0.0
        %366 = vmatprep.subr.mxu0 0.0
        %367 = vmatpush2.msra.mxu0 0.0
        %368 = vmatprep.subr.mxu0 0.0
        %369 = vmatpush2.msra.mxu0 0.0
        %370 = vmatprep.subr.mxu0 0.0
        %371 = vmatpush2.msra.mxu0 0.0
        %372 = vmatprep.subr.mxu0 0.0
        %373 = vmatpush2.msra.mxu0 0.0
        %374 = vmatprep.subr.mxu0 0.0
        %375 = vmatpush2.msra.mxu0 0.0
        %376 = vmatprep.subr.mxu0 0.0
        %377 = vmatpush2.msra.mxu0 0.0
        %378 = vmatprep.subr.mxu0 0.0
        %379 = vmatpush2.msra.mxu0 0.0
        %380 = vmatprep.subr.mxu0 0.0
        %381 = vmatpush2.msra.mxu0 0.0
        %382 = vmatprep.subr.mxu0 0.0
        %383 = vmatpush2.msra.mxu0 0.0
        %384 = vmatprep.subr.mxu0 0.0
        %385 = vmatpush2.msra.mxu0 0.0
        %386 = vmatprep.mubr.f32.mxu0 0.0
        %387 = vmatmul.mubr.f32.gmra.mxu0 %v317
        %v388 = vpop.f32.mrf.mxu0
        %v389 = vadd.f32 0.0, %v388
        %v390 = vpop.f32.mrf.mxu0
        %391 = vmatprep.mubr.f32.mxu0 0.0
        %392 = vmatmul.mubr.f32.gmra.mxu0 %v320
        %v393 = vpop.f32.mrf.mxu0
        %v394 = vadd.f32 0.0, %v393
        %v395 = vpop.f32.mrf.mxu0
        %396 = vdwg.mxu0
        %v398 = vsel %vm315, %v389, 0
        %v401 = vsel %vm315, %v312, 0
        %403 = vmatprep.subr.mxu0 0.0
        %404 = vmatpush1.xpose.msra.mxu0 0.0
        %405 = vmatprep.subr.mxu0 0.0
        %406 = vmatpush1.xpose.msra.mxu0 0.0
        %407 = vmatprep.subr.mxu0 0.0
        %408 = vmatpush1.xpose.msra.mxu0 0.0
        %409 = vmatprep.subr.mxu0 0.0
        %410 = vmatpush1.xpose.msra.mxu0 0.0
        %411 = vmatprep.subr.mxu0 0.0
        %412 = vmatpush1.xpose.msra.mxu0 0.0
        %413 = vmatprep.subr.mxu0 0.0
        %414 = vmatpush1.xpose.msra.mxu0 0.0
        %415 = vmatprep.subr.mxu0 0.0
        %416 = vmatpush1.xpose.msra.mxu0 0.0
        %417 = vmatprep.subr.mxu0 0.0
        %418 = vmatpush1.xpose.msra.mxu0 0.0
        %419 = vmatprep.subr.mxu0 0.0
        %420 = vmatpush1.xpose.msra.mxu0 0.0
        %421 = vmatprep.subr.mxu0 0.0
        %422 = vmatpush1.xpose.msra.mxu0 0.0
        %423 = vmatprep.subr.mxu0 0.0
        %424 = vmatpush1.xpose.msra.mxu0 0.0
        %425 = vmatprep.subr.mxu0 0.0
        %426 = vmatpush1.xpose.msra.mxu0 0.0
        %427 = vmatprep.subr.mxu0 0.0
        %428 = vmatpush1.xpose.msra.mxu0 0.0
        %429 = vmatprep.subr.mxu0 0.0
        %430 = vmatpush1.xpose.msra.mxu0 0.0
        %431 = vmatprep.subr.mxu0 0.0
        %432 = vmatpush1.xpose.msra.mxu0 0.0
        %433 = vmatprep.subr.mxu0 0.0
        %434 = vmatpush1.xpose.msra.mxu0 %v401
        %435 = vmatprep.subr.mxu0 0.0
        %436 = vmatpush2.xpose.msra.mxu0 0.0
        %437 = vmatprep.subr.mxu0 0.0
        %438 = vmatpush2.xpose.msra.mxu0 0.0
        %439 = vmatprep.subr.mxu0 0.0
        %440 = vmatpush2.xpose.msra.mxu0 0.0
        %441 = vmatprep.subr.mxu0 0.0
        %442 = vmatpush2.xpose.msra.mxu0 0.0
        %443 = vmatprep.subr.mxu0 0.0
        %444 = vmatpush2.xpose.msra.mxu0 0.0
        %445 = vmatprep.subr.mxu0 0.0
        %446 = vmatpush2.xpose.msra.mxu0 0.0
        %447 = vmatprep.subr.mxu0 0.0
        %448 = vmatpush2.xpose.msra.mxu0 0.0
        %449 = vmatprep.subr.mxu0 0.0
        %450 = vmatpush2.xpose.msra.mxu0 0.0
        %451 = vmatprep.subr.mxu0 0.0
        %452 = vmatpush2.xpose.msra.mxu0 0.0
        %453 = vmatprep.subr.mxu0 0.0
        %454 = vmatpush2.xpose.msra.mxu0 0.0
        %455 = vmatprep.subr.mxu0 0.0
        %456 = vmatpush2.xpose.msra.mxu0 0.0
        %457 = vmatprep.subr.mxu0 0.0
        %458 = vmatpush2.xpose.msra.mxu0 0.0
        %459 = vmatprep.subr.mxu0 0.0
        %460 = vmatpush2.xpose.msra.mxu0 0.0
        %461 = vmatprep.subr.mxu0 0.0
        %462 = vmatpush2.xpose.msra.mxu0 0.0
        %463 = vmatprep.subr.mxu0 0.0
        %464 = vmatpush2.xpose.msra.mxu0 0.0
        %465 = vmatprep.subr.mxu0 0.0
        %466 = vmatpush2.xpose.msra.mxu0 0.0
        %467 = vmatprep.mubr.f32.mxu0 0.0
        %468 = vmatmul.mubr.f32.gmra.mxu0 %v398
        %v469 = vpop.f32.mrf.mxu0
        %v470 = vadd.f32 0.0, %v469
        %v471 = vpop.f32.mrf.mxu0
        %472 = vdwg.mxu0
        %vm473 = vcmask 64512
        %v474 = vsel %vm473, %v470, -inf
        %475 = vmax.xlane.f32.xlu0 %v474
        %v476 = vpop.xlane.xlu0 %475
        %v477 = vsub.f32 %v470, %v476
        %v478 = vmul.f32 %v477, 1.442695
        %v479 = vpow.pop %v478
        %v480 = vsel %vm473, %v479, 0.0
        %481 = vadd.xlane.f32.xlu0 %v480
        %v482 = vpop.xlane.xlu0 %481
        %v483 = vrcp.pop %v482
        %v484 = vmul.f32 %v482, %v483
        %v485 = vsub.f32 2.0, %v484
        %v486 = vmul.f32 %v483, %v485
        %v487 = vmul.f32 %v479, %v486
        %v489 = vsel %vm473, %v487, 0
        %491 = vmatprep.subr.mxu0 0.0
        %492 = vmatpush1.msra.mxu0 0.0
        %493 = vmatprep.subr.mxu0 0.0
        %494 = vmatpush1.msra.mxu0 0.0
        %495 = vmatprep.subr.mxu0 0.0
        %496 = vmatpush1.msra.mxu0 0.0
        %497 = vmatprep.subr.mxu0 0.0
        %498 = vmatpush1.msra.mxu0 0.0
        %499 = vmatprep.subr.mxu0 0.0
        %500 = vmatpush1.msra.mxu0 0.0
        %501 = vmatprep.subr.mxu0 0.0
        %502 = vmatpush1.msra.mxu0 0.0
        %503 = vmatprep.subr.mxu0 0.0
        %504 = vmatpush1.msra.mxu0 0.0
        %505 = vmatprep.subr.mxu0 0.0
        %506 = vmatpush1.msra.mxu0 0.0
        %507 = vmatprep.subr.mxu0 0.0
        %508 = vmatpush1.msra.mxu0 0.0
        %509 = vmatprep.subr.mxu0 0.0
        %510 = vmatpush1.msra.mxu0 0.0
        %511 = vmatprep.subr.mxu0 0.0
        %512 = vmatpush1.msra.mxu0 0.0
        %513 = vmatprep.subr.mxu0 0.0
        %514 = vmatpush1.msra.mxu0 0.0
        %515 = vmatprep.subr.mxu0 0.0
        %516 = vmatpush1.msra.mxu0 0.0
        %517 = vmatprep.subr.mxu0 0.0
        %518 = vmatpush1.msra.mxu0 0.0
        %519 = vmatprep.subr.mxu0 0.0
        %520 = vmatpush1.msra.mxu0 0.0
        %521 = vmatprep.subr.mxu0 0.0
        %522 = vmatpush1.msra.mxu0 %v311
        %523 = vmatprep.subr.mxu0 0.0
        %524 = vmatpush2.msra.mxu0 0.0
        %525 = vmatprep.subr.mxu0 0.0
        %526 = vmatpush2.msra.mxu0 0.0
        %527 = vmatprep.subr.mxu0 0.0
        %528 = vmatpush2.msra.mxu0 0.0
        %529 = vmatprep.subr.mxu0 0.0
        %530 = vmatpush2.msra.mxu0 0.0
        %531 = vmatprep.subr.mxu0 0.0
        %532 = vmatpush2.msra.mxu0 0.0
        %533 = vmatprep.subr.mxu0 0.0
        %534 = vmatpush2.msra.mxu0 0.0
        %535 = vmatprep.subr.mxu0 0.0
        %536 = vmatpush2.msra.mxu0 0.0
        %537 = vmatprep.subr.mxu0 0.0
        %538 = vmatpush2.msra.mxu0 0.0
        %539 = vmatprep.subr.mxu0 0.0
        %540 = vmatpush2.msra.mxu0 0.0
        %541 = vmatprep.subr.mxu0 0.0
        %542 = vmatpush2.msra.mxu0 0.0
        %543 = vmatprep.subr.mxu0 0.0
        %544 = vmatpush2.msra.mxu0 0.0
        %545 = vmatprep.subr.mxu0 0.0
        %546 = vmatpush2.msra.mxu0 0.0
        %547 = vmatprep.subr.mxu0 0.0
        %548 = vmatpush2.msra.mxu0 0.0
        %549 = vmatprep.subr.mxu0 0.0
        %550 = vmatpush2.msra.mxu0 0.0
        %551 = vmatprep.subr.mxu0 0.0
        %552 = vmatpush2.msra.mxu0 0.0
        %553 = vmatprep.subr.mxu0 0.0
        %554 = vmatpush2.msra.mxu0 0.0
        %555 = vmatprep.mubr.f32.mxu0 0.0
        %556 = vmatmul.mubr.f32.gmra.mxu0 %v489
        %v557 = vpop.f32.mrf.mxu0
        %v558 = vadd.f32 0.0, %v557
        %v559 = vpop.f32.mrf.mxu0
        %560 = vdwg.mxu0
        %v561 = vsub.f32 %v389, %v558
        %v562 = vadd.f32 %v561, 1e-06
        %v563 = vmul.f32 %v562, %v562
        %v564 = vsel %vm315, %v563, 0.0
        %565 = vadd.xlane.f32.xlu0 %v564
        %v566 = vpop.xlane.xlu0 %565
        %v567 = vrsqrt.pop %v566
        %v568 = vmul.f32 %v566, %v567
        %vm569 = vcmp.eq.f32.partialorder %v566, inf
        %v570 = vsel %vm569, %v566, %v568
        %vm571 = vcmp.eq.f32.partialorder %v566, 0.0
        %v572 = vand.u32 %v566, 2147483648
        %v573 = vsel %vm571, %v572, %v570
        %v574 = vsub.f32 0.0, %v573
        %v576 = vlaneseq
        %v577 = vand.u32 %v576, 127
        %v578 = vlaneseq
        %v579 = vshrl.u32 %v578, 7
        %v580 = vsub.s32 %v577, %v579
        %v581 = vrot.slane %v574, %v580
        %vm583 = vcmask 57344
        %584 = vst.msk [vmem:[%s269] sm:$0x1] %vm583, %v581
        %v586 = vsel %vm315, %v394, 0
        %588 = vmatprep.subr.mxu0 0.0
        %589 = vmatpush1.xpose.msra.mxu0 0.0
        %590 = vmatprep.subr.mxu0 0.0
        %591 = vmatpush1.xpose.msra.mxu0 0.0
        %592 = vmatprep.subr.mxu0 0.0
        %593 = vmatpush1.xpose.msra.mxu0 0.0
        %594 = vmatprep.subr.mxu0 0.0
        %595 = vmatpush1.xpose.msra.mxu0 0.0
        %596 = vmatprep.subr.mxu0 0.0
        %597 = vmatpush1.xpose.msra.mxu0 0.0
        %598 = vmatprep.subr.mxu0 0.0
        %599 = vmatpush1.xpose.msra.mxu0 0.0
        %600 = vmatprep.subr.mxu0 0.0
        %601 = vmatpush1.xpose.msra.mxu0 0.0
        %602 = vmatprep.subr.mxu0 0.0
        %603 = vmatpush1.xpose.msra.mxu0 0.0
        %604 = vmatprep.subr.mxu0 0.0
        %605 = vmatpush1.xpose.msra.mxu0 0.0
        %606 = vmatprep.subr.mxu0 0.0
        %607 = vmatpush1.xpose.msra.mxu0 0.0
        %608 = vmatprep.subr.mxu0 0.0
        %609 = vmatpush1.xpose.msra.mxu0 0.0
        %610 = vmatprep.subr.mxu0 0.0
        %611 = vmatpush1.xpose.msra.mxu0 0.0
        %612 = vmatprep.subr.mxu0 0.0
        %613 = vmatpush1.xpose.msra.mxu0 0.0
        %614 = vmatprep.subr.mxu0 0.0
        %615 = vmatpush1.xpose.msra.mxu0 0.0
        %616 = vmatprep.subr.mxu0 0.0
        %617 = vmatpush1.xpose.msra.mxu0 0.0
        %618 = vmatprep.subr.mxu0 0.0
        %619 = vmatpush1.xpose.msra.mxu0 %v401
        %620 = vmatprep.subr.mxu0 0.0
        %621 = vmatpush2.xpose.msra.mxu0 0.0
        %622 = vmatprep.subr.mxu0 0.0
        %623 = vmatpush2.xpose.msra.mxu0 0.0
        %624 = vmatprep.subr.mxu0 0.0
        %625 = vmatpush2.xpose.msra.mxu0 0.0
        %626 = vmatprep.subr.mxu0 0.0
        %627 = vmatpush2.xpose.msra.mxu0 0.0
        %628 = vmatprep.subr.mxu0 0.0
        %629 = vmatpush2.xpose.msra.mxu0 0.0
        %630 = vmatprep.subr.mxu0 0.0
        %631 = vmatpush2.xpose.msra.mxu0 0.0
        %632 = vmatprep.subr.mxu0 0.0
        %633 = vmatpush2.xpose.msra.mxu0 0.0
        %634 = vmatprep.subr.mxu0 0.0
        %635 = vmatpush2.xpose.msra.mxu0 0.0
        %636 = vmatprep.subr.mxu0 0.0
        %637 = vmatpush2.xpose.msra.mxu0 0.0
        %638 = vmatprep.subr.mxu0 0.0
        %639 = vmatpush2.xpose.msra.mxu0 0.0
        %640 = vmatprep.subr.mxu0 0.0
        %641 = vmatpush2.xpose.msra.mxu0 0.0
        %642 = vmatprep.subr.mxu0 0.0
        %643 = vmatpush2.xpose.msra.mxu0 0.0
        %644 = vmatprep.subr.mxu0 0.0
        %645 = vmatpush2.xpose.msra.mxu0 0.0
        %646 = vmatprep.subr.mxu0 0.0
        %647 = vmatpush2.xpose.msra.mxu0 0.0
        %648 = vmatprep.subr.mxu0 0.0
        %649 = vmatpush2.xpose.msra.mxu0 0.0
        %650 = vmatprep.subr.mxu0 0.0
        %651 = vmatpush2.xpose.msra.mxu0 0.0
        %652 = vmatprep.mubr.f32.mxu0 0.0
        %653 = vmatmul.mubr.f32.gmra.mxu0 %v586
        %v654 = vpop.f32.mrf.mxu0
        %v655 = vadd.f32 0.0, %v654
        %v656 = vpop.f32.mrf.mxu0
        %657 = vdwg.mxu0
        %v658 = vsel %vm473, %v655, -inf
        %659 = vmax.xlane.f32.xlu0 %v658
        %v660 = vpop.xlane.xlu0 %659
        %v661 = vsub.f32 %v655, %v660
        %v662 = vmul.f32 %v661, 1.442695
        %v663 = vpow.pop %v662
        %v664 = vsel %vm473, %v663, 0.0
        %665 = vadd.xlane.f32.xlu0 %v664
        %v666 = vpop.xlane.xlu0 %665
        %v667 = vrcp.pop %v666
        %v668 = vmul.f32 %v666, %v667
        %v669 = vsub.f32 2.0, %v668
        %v670 = vmul.f32 %v667, %v669
        %v671 = vmul.f32 %v663, %v670
        %v673 = vsel %vm473, %v671, 0
        %675 = vmatprep.subr.mxu0 0.0
        %676 = vmatpush1.msra.mxu0 0.0
        %677 = vmatprep.subr.mxu0 0.0
        %678 = vmatpush1.msra.mxu0 0.0
        %679 = vmatprep.subr.mxu0 0.0
        %680 = vmatpush1.msra.mxu0 0.0
        %681 = vmatprep.subr.mxu0 0.0
        %682 = vmatpush1.msra.mxu0 0.0
        %683 = vmatprep.subr.mxu0 0.0
        %684 = vmatpush1.msra.mxu0 0.0
        %685 = vmatprep.subr.mxu0 0.0
        %686 = vmatpush1.msra.mxu0 0.0
        %687 = vmatprep.subr.mxu0 0.0
        %688 = vmatpush1.msra.mxu0 0.0
        %689 = vmatprep.subr.mxu0 0.0
        %690 = vmatpush1.msra.mxu0 0.0
        %691 = vmatprep.subr.mxu0 0.0
        %692 = vmatpush1.msra.mxu0 0.0
        %693 = vmatprep.subr.mxu0 0.0
        %694 = vmatpush1.msra.mxu0 0.0
        %695 = vmatprep.subr.mxu0 0.0
        %696 = vmatpush1.msra.mxu0 0.0
        %697 = vmatprep.subr.mxu0 0.0
        %698 = vmatpush1.msra.mxu0 0.0
        %699 = vmatprep.subr.mxu0 0.0
        %700 = vmatpush1.msra.mxu0 0.0
        %701 = vmatprep.subr.mxu0 0.0
        %702 = vmatpush1.msra.mxu0 0.0
        %703 = vmatprep.subr.mxu0 0.0
        %704 = vmatpush1.msra.mxu0 0.0
        %705 = vmatprep.subr.mxu0 0.0
        %706 = vmatpush1.msra.mxu0 %v311
        %707 = vmatprep.subr.mxu0 0.0
        %708 = vmatpush2.msra.mxu0 0.0
        %709 = vmatprep.subr.mxu0 0.0
        %710 = vmatpush2.msra.mxu0 0.0
        %711 = vmatprep.subr.mxu0 0.0
        %712 = vmatpush2.msra.mxu0 0.0
        %713 = vmatprep.subr.mxu0 0.0
        %714 = vmatpush2.msra.mxu0 0.0
        %715 = vmatprep.subr.mxu0 0.0
        %716 = vmatpush2.msra.mxu0 0.0
        %717 = vmatprep.subr.mxu0 0.0
        %718 = vmatpush2.msra.mxu0 0.0
        %719 = vmatprep.subr.mxu0 0.0
        %720 = vmatpush2.msra.mxu0 0.0
        %721 = vmatprep.subr.mxu0 0.0
        %722 = vmatpush2.msra.mxu0 0.0
        %723 = vmatprep.subr.mxu0 0.0
        %724 = vmatpush2.msra.mxu0 0.0
        %725 = vmatprep.subr.mxu0 0.0
        %726 = vmatpush2.msra.mxu0 0.0
        %727 = vmatprep.subr.mxu0 0.0
        %728 = vmatpush2.msra.mxu0 0.0
        %729 = vmatprep.subr.mxu0 0.0
        %730 = vmatpush2.msra.mxu0 0.0
        %731 = vmatprep.subr.mxu0 0.0
        %732 = vmatpush2.msra.mxu0 0.0
        %733 = vmatprep.subr.mxu0 0.0
        %734 = vmatpush2.msra.mxu0 0.0
        %735 = vmatprep.subr.mxu0 0.0
        %736 = vmatpush2.msra.mxu0 0.0
        %737 = vmatprep.subr.mxu0 0.0
        %738 = vmatpush2.msra.mxu0 0.0
        %739 = vmatprep.mubr.f32.mxu0 0.0
        %740 = vmatmul.mubr.f32.gmra.mxu0 %v673
        %v741 = vpop.f32.mrf.mxu0
        %v742 = vadd.f32 0.0, %v741
        %v743 = vpop.f32.mrf.mxu0
        %744 = vdwg.mxu0
        %v745 = vsub.f32 %v394, %v742
        %v746 = vadd.f32 %v745, 1e-06
        %v747 = vmul.f32 %v746, %v746
        %v748 = vsel %vm315, %v747, 0.0
        %749 = vadd.xlane.f32.xlu0 %v748
        %v750 = vpop.xlane.xlu0 %749
        %v751 = vrsqrt.pop %v750
        %v752 = vmul.f32 %v750, %v751
        %vm753 = vcmp.eq.f32.partialorder %v750, inf
        %v754 = vsel %vm753, %v750, %v752
        %vm755 = vcmp.eq.f32.partialorder %v750, 0.0
        %v756 = vand.u32 %v750, 2147483648
        %v757 = vsel %vm755, %v756, %v754
        %v758 = vsub.f32 0.0, %v757
        %v760 = vlaneseq
        %v761 = vshrl.u32 %v760, 7
        %v762 = vsub.s32 %v577, %v761
        %v763 = vrot.slane %v758, %v762
        %765 = vst.msk [vmem:[%s269 + $0x1] sm:$0x1] %vm583, %v763
        %s766 = sand.u32 %s146, 1
        %s767 = scalar_lea.sflag [#allocation4], %s766
        %s768 = sand.u32 %s146, 1
        %s769 = smul.addr %s768, 2
        %s770 = scalar_lea.vmem [#allocation7], %s769
        // Predicated region
        $region49: #{tpu_custom_call.1} parent=39 // pred_check
          %p771 = pneg %p156
        $region50: #{tpu_custom_call.1} parent=39 // pred_check_branch
          %773 = sbr.rel (%p771) target = $region52
        $region51: #{tpu_custom_call.1} parent=39 // pred_region
          %s775 = ssub.s32 32, 32
          %776 = vsyncadd %s767, %s775
          %s777 = smul.addr %s23, 32
          %s778 = scalar_lea.hbm %s5, %s777
          %s780 = sshll.u32 %s770, 4
          %s781 = int_to_ptr.vmem [resolvable:$true] %s780
          %783 = dma.vmem_to_hbm [thread:$0]  %s781, 32, %s778, %s767
        $region52: #{tpu_custom_call.1} parent=39 // pred_fallthru
          _
      $region40: #{tpu_custom_call.1} parent=5 // pred_fallthru
        _
      %p784 = scmp.le.s32.totalorder 2, %s18
      // Predicated region
      $region53: #{tpu_custom_call.1} parent=5 // pred_check
        %p785 = pneg %p784
      $region54: #{tpu_custom_call.1} parent=5 // pred_check_branch
        %787 = sbr.rel (%p785) target = $region56
      $region55: #{tpu_custom_call.1} parent=5 // pred_region
        %s788 = ssub.s32 %s18, 2
        // Predicated region
        $region57: #{tpu_custom_call.1} parent=55 // pred_check
          %p789 = pneg %p162
        $region58: #{tpu_custom_call.1} parent=55 // pred_check_branch
          %791 = sbr.rel (%p789) target = $region60
        $region59: #{tpu_custom_call.1} parent=55 // pred_region
          %s792 = sand.u32 %s147, 1
          %s793 = scalar_lea.sflag [#allocation4], %s792
          %s794 = sand.u32 %s147, 1
          %s795 = smul.addr %s794, 2
          %s796 = scalar_lea.vmem [#allocation7], %s795
          %797 = dma.done %s793, 32
        $region60: #{tpu_custom_call.1} parent=55 // pred_fallthru
          _
      $region56: #{tpu_custom_call.1} parent=5 // pred_fallthru
        _
    $region6: #{tpu_custom_call.1} parent=1 // loop_footer
      %s22 = sadd.s32 1, %s18
    $region7: #{tpu_custom_call.1} parent=1 // loop_footer_branch
      %17 = sbr.rel target = $region3
    $region8: #{tpu_custom_call.1} parent=1 // loop_exit
      _
    %798 = vsyncpa [#allocation3], 1
    %s799 = scalar_lea.sflag [#allocation3], 1
    %800 = vsyncpa %s799, 1
    %801 = vsyncpa [#allocation6], 1
    %802 = vsyncpa [#allocation4], 1
    %s803 = scalar_lea.sflag [#allocation4], 1
    %804 = vsyncpa %s803, 1

</llo_original>
